<compile_context>
chip_gen: v7x
topology: tpu7x:2x2x1
jax: 0.10.0
libtpu: 0.0.40
codegen_flags: <defaults>
</compile_context>

<pallas_src>
import functools

import jax
import jax.numpy as jnp
from jax.experimental import pallas as pl
from jax.experimental.pallas import tpu as pltpu

_LANES = 128


def _round_up(x, m):
    return ((x + m - 1) // m) * m


def _bce_partial_kernel(x_ref, t_ref, out_ref, *, full_rows, rem_lanes, has_tail):
    """Per-block partial sums of BCE(sigmoid(x), t).

    x_ref / t_ref : (block_r, 128) input tile (last block may be ragged)
    out_ref       : (1, 8, 128) lane-dense partial-sum slot for this block
    full_rows     : number of fully-valid 128-wide rows in the flattened input
    rem_lanes     : valid lanes in the (single) partial tail row
    has_tail      : static flag; False when every block element is valid
    """
    x = x_ref[...].astype(jnp.float32)
    t = t_ref[...].astype(jnp.float32)
    block_r, lanes = x.shape

    # Stable BCE-with-logits:  max(x,0) - x*t + log1p(exp(-|x|))
    loss = jnp.maximum(x, 0.0) - x * t + jnp.log1p(jnp.exp(-jnp.abs(x)))

    def _reduce(l):
        # (block_r, 128) -> (8, 128), VPU-only.  Two-stage sum so the add
        # chain is not block_r/8 deep into a single vreg.
        if block_r % 64 == 0 and block_r >= 64:
            return l.reshape(block_r // 64, 8, 8, lanes).sum(axis=0).sum(axis=0)
        return l.reshape(block_r // 8, 8, lanes).sum(axis=0)

    if not has_tail:
        # Fast path: every element of every block is valid -> no mask math.
        out_ref[...] = _reduce(loss)[None]
    else:
        i = pl.program_id(0)
        is_last = i == pl.num_programs(0) - 1

        @pl.when(jnp.logical_not(is_last))
        def _():
            out_ref[...] = _reduce(loss)[None]

        @pl.when(is_last)
        def _():
            # Only the final block contains padded / out-of-bounds elements.
            row = jax.lax.broadcasted_iota(jnp.int32, (block_r, lanes), 0)
            lane = jax.lax.broadcasted_iota(jnp.int32, (block_r, lanes), 1)
            grow = i * block_r + row
            mask = (grow < full_rows) | ((grow == full_rows) & (lane < rem_lanes))
            out_ref[...] = _reduce(jnp.where(mask, loss, 0.0))[None]


def bce_sigmoid_loss(scores, target_scores, reduction="mean", block_rows=8192):
    """BCELoss(sigmoid(scores), target_scores, reduction) / scores.shape[0]."""
    assert scores.shape == target_scores.shape
    B = scores.shape[0]
    N = int(scores.size)

    x = scores.reshape(-1)
    t = target_scores.reshape(-1)

    rows = pl.cdiv(N, _LANES)
    if N == rows * _LANES:
        # numel is already a multiple of 128: pure reshape, zero extra HBM traffic.
        rows_arr = rows
    else:
        # Unavoidable flat pad up to a lane-dense slab (rounded to 8 rows).
        # This is a one-row-scale pad, NOT a pad up to a block_r multiple.
        rows_arr = _round_up(rows, 8)
        pad = rows_arr * _LANES - N
        x = jnp.pad(x, (0, pad))
        t = jnp.pad(t, (0, pad))
    x2 = x.reshape(rows_arr, _LANES)
    t2 = t.reshape(rows_arr, _LANES)

    # Big blocks to amortize the ~0.35us/step grid overhead, but keep at least
    # 2 blocks so both v7x TensorCores get work under "parallel" semantics.
    block_r = min(_round_up(block_rows, 8), _round_up(max(rows_arr // 2, 8), 8))
    num_blocks = pl.cdiv(rows_arr, block_r)
    has_tail = N < num_blocks * block_r * _LANES

    kernel = functools.partial(
        _bce_partial_kernel,
        full_rows=N // _LANES,
        rem_lanes=N % _LANES,
        has_tail=has_tail,
    )

    itemsize = jnp.dtype(x2.dtype).itemsize
    out_bytes = num_blocks * 8 * _LANES * 4
    # 2 inputs x double buffer x tile bytes, plus headroom for outputs/scratch.
    vmem_limit = min(2 * 2 * block_r * _LANES * itemsize + (4 << 20), 64 << 20)

    partials = pl.pallas_call(
        kernel,
        out_shape=jax.ShapeDtypeStruct((num_blocks, 8, _LANES), jnp.float32),
        grid_spec=pltpu.PrefetchScalarGridSpec(
            num_scalar_prefetch=0,
            grid=(num_blocks,),
            in_specs=[
                pl.BlockSpec((block_r, _LANES), lambda i: (i, 0)),
                pl.BlockSpec((block_r, _LANES), lambda i: (i, 0)),
            ],
            out_specs=pl.BlockSpec((1, 8, _LANES), lambda i: (i, 0, 0)),
        ),
        compiler_params=pltpu.CompilerParams(
            dimension_semantics=("parallel",),
            vmem_limit_bytes=vmem_limit,
        ),
        cost_estimate=pl.CostEstimate(
            flops=10 * N,
            transcendentals=2 * N,
            bytes_accessed=2 * N * itemsize + out_bytes,
        ),
    )(x2, t2)

    total = jnp.sum(partials)  # tiny finish: num_blocks * 1024 f32 values

    if reduction == "mean":
        red = total / jnp.float32(N)
    elif reduction == "sum":
        red = total
    else:
        # TODO(synk): reduction='none' (per-element output) is not wired through
        # the partial-sum kernel; only 'mean' and 'sum' are supported here.
        raise NotImplementedError(reduction)

    # final "/ len(scores)" from the PyTorch forward
    return red / jnp.float32(B)


if __name__ == "__main__":
    key = jax.random.PRNGKey(0)
    k1, k2 = jax.random.split(key)

    B, D = 16, 256  # small, tile-friendly demo shape (no-pad fast path, 2 blocks)
    scores = jax.random.normal(k1, (B, D), dtype=jnp.float32)
    target_scores = jax.random.uniform(k2, (B, D), dtype=jnp.float32)

    out = bce_sigmoid_loss(scores, target_scores, reduction="mean")
    out = jax.block_until_ready(out)

    # sanity check against pure-JAX reference (sigmoid -> BCE -> mean -> /B)
    p = jax.nn.sigmoid(scores)
    ref = jnp.mean(-(target_scores * jnp.log(p) +
                     (1.0 - target_scores) * jnp.log1p(-p))) / B
    assert jnp.allclose(out, ref, atol=1e-5, rtol=1e-5), (out, ref)

    # also exercise the ragged / masked-last-block path with a non-aligned size
    B2, D2 = 7, 333
    s2 = jax.random.normal(k1, (B2, D2), dtype=jnp.float32)
    t2 = jax.random.uniform(k2, (B2, D2), dtype=jnp.float32)
    out2 = jax.block_until_ready(bce_sigmoid_loss(s2, t2, reduction="sum"))
    p2 = jax.nn.sigmoid(s2)
    ref2 = jnp.sum(-(t2 * jnp.log(p2) + (1.0 - t2) * jnp.log1p(-p2))) / B2
    assert jnp.allclose(out2, ref2, atol=1e-4, rtol=1e-5), (out2, ref2)

    print("KERNEL_OK")
</pallas_src>

<mosaic_0001>
module attributes {stable_mosaic.version = 11 : i64} {
  func.func @_bce_partial_kernel(%arg0: i32, %arg1: memref<16x128xf32, #tpu.memory_space<vmem>>, %arg2: memref<16x128xf32, #tpu.memory_space<vmem>>, %arg3: memref<1x8x128xf32, #tpu.memory_space<vmem>>) attributes {dimension_semantics = [#tpu.dimension_semantics<parallel>], iteration_bounds = array<i64: 2>, scalar_prefetch = 0 : i64, scratch_operands = 0 : i64, tpu.core_type = #tpu.core_type<tc>, window_params = [{transform_indices = @transform_0, window_bounds = array<i64: 16, 128>}, {transform_indices = @transform_1, window_bounds = array<i64: 16, 128>}, {transform_indices = @transform_2, window_bounds = array<i64: 1, 8, 128>}]} {
    %c0 = arith.constant 0 : index
    %c0_0 = arith.constant 0 : index
    %0 = vector.load %arg1[%c0, %c0_0] : memref<16x128xf32, #tpu.memory_space<vmem>>, vector<16x128xf32>
    %c0_1 = arith.constant 0 : index
    %c0_2 = arith.constant 0 : index
    %1 = vector.load %arg2[%c0_1, %c0_2] : memref<16x128xf32, #tpu.memory_space<vmem>>, vector<16x128xf32>
    %cst = arith.constant 0.000000e+00 : f32
    %2 = vector.broadcast %cst : f32 to vector<16x128xf32>
    %3 = arith.maximumf %0, %2 : vector<16x128xf32>
    %4 = arith.mulf %0, %1 : vector<16x128xf32>
    %5 = arith.subf %3, %4 : vector<16x128xf32>
    %6 = math.absf %0 : vector<16x128xf32>
    %cst_3 = arith.constant 0.000000e+00 : f32
    %7 = vector.broadcast %cst_3 : f32 to vector<16x128xf32>
    %8 = arith.subf %7, %6 : vector<16x128xf32>
    %9 = math.exp %8 : vector<16x128xf32>
    %10 = math.log1p %9 : vector<16x128xf32>
    %11 = arith.addf %5, %10 : vector<16x128xf32>
    %12 = vector.shape_cast %11 : vector<16x128xf32> to vector<2x8x128xf32>
    %cst_4 = arith.constant dense<0.000000e+00> : vector<8x128xf32>
    %13 = vector.multi_reduction <add>, %12, %cst_4 [0] : vector<2x8x128xf32> to vector<8x128xf32>
    %14 = vector.shape_cast %13 : vector<8x128xf32> to vector<1x8x128xf32>
    %c0_5 = arith.constant 0 : index
    %c0_6 = arith.constant 0 : index
    %c0_7 = arith.constant 0 : index
    %15 = vector.load %arg3[%c0_5, %c0_6, %c0_7] : memref<1x8x128xf32, #tpu.memory_space<vmem>>, vector<1x8x128xf32>
    tpu.vector_store %arg3[%c0_5, %c0_6, %c0_7], %14 {strides = array<i32>} : memref<1x8x128xf32, #tpu.memory_space<vmem>>, vector<1x8x128xf32>,
    return
  }
  func.func @transform_0(%arg0: i32) -> (i32, i32) {
    %c0_i32 = arith.constant 0 : i32
    %c0_i32_0 = arith.constant 0 : i32
    return %arg0, %c0_i32 : i32, i32
  }
  func.func @transform_1(%arg0: i32) -> (i32, i32) {
    %c0_i32 = arith.constant 0 : i32
    %c0_i32_0 = arith.constant 0 : i32
    return %arg0, %c0_i32 : i32, i32
  }
  func.func @transform_2(%arg0: i32) -> (i32, i32, i32) {
    %c0_i32 = arith.constant 0 : i32
    %c0_i32_0 = arith.constant 0 : i32
    %c0_i32_1 = arith.constant 0 : i32
    return %arg0, %c0_i32, %c0_i32_0 : i32, i32, i32
  }
}

</mosaic_0001>

<llo_original>
// kernel: tpu_custom_call.1
$region0: #{tpu_custom_call.1}
  #allocation0 [shape = 'u32[]', space=smem, size = 0x4, offset = 0x4, fixed_abs, tag = 'smem constant byte address 0x4 - core index']
  #allocation1 [shape = 'u32[144,128]{1,0:T(1,128)}', space=vmem, size = 0x12000, scoped, tag = 'internal scratch']
  %s0 = inlined_call_operand.hbm [shape: f32[32,128], index: 0, kind: input, shape index: {}]
  %s1 = inlined_call_operand.hbm [shape: f32[32,128], index: 1, kind: input, shape index: {}]
  %s2 = inlined_call_operand.hbm [shape: f32[2,8,128], index: 2, kind: output, shape index: {}]
  %s3 = sld [smem:[#allocation0]]
  $region49: #{tpu_custom_call.1} parent=0
    _
  %s5 = ssub.s32 1, %s3
  %s6 = scalar_select 0, %s5, %s3
  $region1: #{tpu_custom_call.1} parent=0
    #allocation2 [shape = 'u8[16384]{0}', space=vmem, size = 0x4000, scoped, tag = 'input window, operand 0']
    #allocation3 [shape = 's32[2]{0}', space=sflag, size = 0x8, scoped, tag = 'scoped memory for tpu_custom_call.1']
    #allocation4 [shape = 's32[2]{0}', space=sflag, size = 0x8, scoped, tag = 'scoped memory for tpu_custom_call.1']
    #allocation5 [shape = 'u8[16384]{0}', space=vmem, size = 0x4000, scoped, tag = 'input window, operand 1']
    #allocation6 [shape = 's32[2]{0}', space=sflag, size = 0x8, scoped, tag = 'scoped memory for tpu_custom_call.1']
    #allocation7 [shape = 'u8[8192]{0}', space=vmem, size = 0x2000, scoped, tag = 'output window, operand 0']
    %7 = vsyncpa [#allocation3], 0
    %s8 = scalar_lea.sflag [#allocation3], 1
    %9 = vsyncpa %s8, 0
    %10 = vsyncpa [#allocation6], 0
    %s11 = scalar_lea.sflag [#allocation6], 1
    %12 = vsyncpa %s11, 0
    %13 = vsyncpa [#allocation4], 0
    %s14 = scalar_lea.sflag [#allocation4], 1
    %15 = vsyncpa %s14, 0
    loop: start=0, step=1, limit=4
    $region2: #{tpu_custom_call.1} parent=1 // loop_pre_header
      _
    $region3: #{tpu_custom_call.1} parent=1 // loop_header
      %s17 = sphi 0, %s21
      %p18 = scmp.ge.s32.totalorder %s17, 4
      %s27 = sphi 0, %s29
      %s30 = sphi 0, %s27
      %s31 = sphi 0, %s30
      %s47 = sphi 0, %s31
      %s53 = sphi 0, %s55
      %s56 = sphi 0, %s53
      %s57 = sphi 0, %s56
      %s73 = sphi 0, %s57
      %s79 = sphi 0, %s81
      %s82 = sphi 0, %s79
      %s83 = sphi 0, %s82
      %s99 = sphi 0, %s83
    $region4: #{tpu_custom_call.1} parent=1 // loop_header_branch
      %20 = sbr.rel (%p18) target = $region8
    $region5: #{tpu_custom_call.1} parent=1 // loop_body
      %s22 = ssub.s32 %s17, 1
      %s23 = ssub.s32 %s17, 2
      %s24 = sadd.s32 %s17, 1
      %s25 = ssub.s32 %s17, %s24
      %p26 = scmp.eq.s32.totalorder %s25, 0
      %s28 = sadd.s32 %s27, 1
      %s29 = scalar_select %p26, %s27, %s28
      %p32 = pneg %p26
      %p33 = scmp.eq.s32.totalorder %s17, 1
      %p34 = por %p32, %p33
      %p35 = scmp.ne.s32.totalorder %s27, %s30
      %p36 = scmp.eq.s32.totalorder %s17, 0
      %p37 = por %p35, %p36
      %p38 = scmp.ne.s32.totalorder %s27, %s30
      %p39 = scmp.eq.s32.totalorder %s22, 1
      %p40 = por %p38, %p39
      %p41 = scmp.ne.s32.totalorder %s30, %s31
      %p42 = scmp.eq.s32.totalorder %s22, 0
      %p43 = por %p41, %p42
      %p44 = scmp.ne.s32.totalorder %s30, %s31
      %p45 = scmp.eq.s32.totalorder %s23, 1
      %p46 = por %p44, %p45
      %p48 = scmp.ne.s32.totalorder %s31, %s47
      %p49 = scmp.eq.s32.totalorder %s23, 0
      %p50 = por %p48, %p49
      %s51 = ssub.s32 %s17, %s24
      %p52 = scmp.eq.s32.totalorder %s51, 0
      %s54 = sadd.s32 %s53, 1
      %s55 = scalar_select %p52, %s53, %s54
      %p58 = pneg %p52
      %p59 = scmp.eq.s32.totalorder %s17, 1
      %p60 = por %p58, %p59
      %p61 = scmp.ne.s32.totalorder %s53, %s56
      %p62 = scmp.eq.s32.totalorder %s17, 0
      %p63 = por %p61, %p62
      %p64 = scmp.ne.s32.totalorder %s53, %s56
      %p65 = scmp.eq.s32.totalorder %s22, 1
      %p66 = por %p64, %p65
      %p67 = scmp.ne.s32.totalorder %s56, %s57
      %p68 = scmp.eq.s32.totalorder %s22, 0
      %p69 = por %p67, %p68
      %p70 = scmp.ne.s32.totalorder %s56, %s57
      %p71 = scmp.eq.s32.totalorder %s23, 1
      %p72 = por %p70, %p71
      %p74 = scmp.ne.s32.totalorder %s57, %s73
      %p75 = scmp.eq.s32.totalorder %s23, 0
      %p76 = por %p74, %p75
      %s77 = ssub.s32 %s17, %s24
      %p78 = scmp.eq.s32.totalorder %s77, 0
      %s80 = sadd.s32 %s79, 1
      %s81 = scalar_select %p78, %s79, %s80
      %p84 = pneg %p78
      %p85 = scmp.eq.s32.totalorder %s17, 1
      %p86 = por %p84, %p85
      %p87 = scmp.ne.s32.totalorder %s79, %s82
      %p88 = scmp.eq.s32.totalorder %s17, 0
      %p89 = por %p87, %p88
      %p90 = scmp.ne.s32.totalorder %s79, %s82
      %p91 = scmp.eq.s32.totalorder %s22, 1
      %p92 = por %p90, %p91
      %p93 = scmp.ne.s32.totalorder %s82, %s83
      %p94 = scmp.eq.s32.totalorder %s22, 0
      %p95 = por %p93, %p94
      %p96 = scmp.ne.s32.totalorder %s82, %s83
      %p97 = scmp.eq.s32.totalorder %s23, 1
      %p98 = por %p96, %p97
      %p100 = scmp.ne.s32.totalorder %s83, %s99
      %p101 = scmp.eq.s32.totalorder %s23, 0
      %p102 = por %p100, %p101
      %p103 = scmp.le.s32.totalorder 1, %s17
      %p104 = scmp.lt.s32.totalorder %s17, 3
      %p105 = pnand %p103, %p104
      %p106 = pneg %p105
      // Predicated region
      $region9: #{tpu_custom_call.1} parent=5 // pred_check
        _
      $region10: #{tpu_custom_call.1} parent=5 // pred_check_branch
        %108 = sbr.rel (%p105) target = $region12
      $region11: #{tpu_custom_call.1} parent=5 // pred_region
        %s109 = ssub.s32 %s17, 1
      $region12: #{tpu_custom_call.1} parent=5 // pred_fallthru
        _
      %p110 = scmp.lt.s32.totalorder %s17, 2
      // Predicated region
      $region13: #{tpu_custom_call.1} parent=5 // pred_check
        %p111 = pneg %p110
      $region14: #{tpu_custom_call.1} parent=5 // pred_check_branch
        %113 = sbr.rel (%p111) target = $region16
      $region15: #{tpu_custom_call.1} parent=5 // pred_region
        // Predicated region
        $region17: #{tpu_custom_call.1} parent=15 // pred_check
          %p114 = pneg %p37
        $region18: #{tpu_custom_call.1} parent=15 // pred_check_branch
          %116 = sbr.rel (%p114) target = $region20
        $region19: #{tpu_custom_call.1} parent=15 // pred_region
          %s117 = sand.u32 %s27, 1
          %s118 = scalar_lea.sflag [#allocation3], %s117
          %s119 = sand.u32 %s27, 1
          %s120 = smul.addr %s119, 16
          %s121 = scalar_lea.vmem [#allocation2], %s120
          %s122 = smul.u32 2, %s17
          %s124 = ssub.s32 256, 256
          %125 = vsyncadd %s118, %s124
          %s126 = smul.addr %s122, 128
          %s127 = scalar_lea.hbm %s0, %s126
          %s128 = sshll.u32 %s121, 4
          %s129 = int_to_ptr.vmem [resolvable:$true] %s128
          %134 = dma.hbm_to_vmem [thread:$0]  %s127, 256, %s129, %s118, 128, 128, 8
        $region20: #{tpu_custom_call.1} parent=15 // pred_fallthru
          _
        // Predicated region
        $region21: #{tpu_custom_call.1} parent=15 // pred_check
          %p135 = pneg %p63
        $region22: #{tpu_custom_call.1} parent=15 // pred_check_branch
          %137 = sbr.rel (%p135) target = $region24
        $region23: #{tpu_custom_call.1} parent=15 // pred_region
          %s138 = sand.u32 %s53, 1
          %s139 = scalar_lea.sflag [#allocation6], %s138
          %s140 = sand.u32 %s53, 1
          %s141 = smul.addr %s140, 16
          %s142 = scalar_lea.vmem [#allocation5], %s141
          %s143 = smul.u32 2, %s17
          %s145 = ssub.s32 256, 256
          %146 = vsyncadd %s139, %s145
          %s147 = smul.addr %s143, 128
          %s148 = scalar_lea.hbm %s1, %s147
          %s149 = sshll.u32 %s142, 4
          %s150 = int_to_ptr.vmem [resolvable:$true] %s149
          %155 = dma.hbm_to_vmem [thread:$0]  %s148, 256, %s150, %s139, 128, 128, 8
        $region24: #{tpu_custom_call.1} parent=15 // pred_fallthru
          _
      $region16: #{tpu_custom_call.1} parent=5 // pred_fallthru
        _
      %p156 = scmp.le.s32.totalorder 1, %s17
      %p157 = scmp.lt.s32.totalorder %s17, 3
      %p158 = pnand %p156, %p157
      %p159 = pneg %p158
      // Predicated region
      $region25: #{tpu_custom_call.1} parent=5 // pred_check
        _
      $region26: #{tpu_custom_call.1} parent=5 // pred_check_branch
        %161 = sbr.rel (%p158) target = $region28
      $region27: #{tpu_custom_call.1} parent=5 // pred_region
        %s162 = ssub.s32 %s17, 1
        %s163 = sand.u32 %s30, 1
        %s164 = scalar_lea.sflag [#allocation3], %s163
        %s165 = sand.u32 %s30, 1
        %s166 = smul.addr %s165, 16
        %s167 = scalar_lea.vmem [#allocation2], %s166
        // Predicated region
        $region29: #{tpu_custom_call.1} parent=27 // pred_check
          %p168 = pneg %p43
        $region30: #{tpu_custom_call.1} parent=27 // pred_check_branch
          %170 = sbr.rel (%p168) target = $region32
        $region31: #{tpu_custom_call.1} parent=27 // pred_region
          %171 = dma.done %s164, 256
        $region32: #{tpu_custom_call.1} parent=27 // pred_fallthru
          _
        %s172 = sand.u32 %s56, 1
        %s173 = scalar_lea.sflag [#allocation6], %s172
        %s174 = sand.u32 %s56, 1
        %s175 = smul.addr %s174, 16
        %s176 = scalar_lea.vmem [#allocation5], %s175
        // Predicated region
        $region33: #{tpu_custom_call.1} parent=27 // pred_check
          %p177 = pneg %p69
        $region34: #{tpu_custom_call.1} parent=27 // pred_check_branch
          %179 = sbr.rel (%p177) target = $region36
        $region35: #{tpu_custom_call.1} parent=27 // pred_region
          %180 = dma.done %s173, 256
        $region36: #{tpu_custom_call.1} parent=27 // pred_fallthru
          _
        %s181 = sand.u32 %s30, 1
        %s182 = scalar_lea.sflag [#allocation3], %s181
        %s183 = sand.u32 %s30, 1
        %s184 = smul.addr %s183, 16
        %s185 = scalar_lea.vmem [#allocation2], %s184
        %p186 = pneg %p43
        %p187 = pneg %p40
        %s188 = sand.u32 %s56, 1
        %s189 = scalar_lea.sflag [#allocation6], %s188
        %s190 = sand.u32 %s56, 1
        %s191 = smul.addr %s190, 16
        %s192 = scalar_lea.vmem [#allocation5], %s191
        %p193 = pneg %p69
        %p194 = pneg %p66
        %p195 = pneg %p95
        %p196 = pneg %p92
        %s197 = sand.u32 %s82, 1
        %s198 = scalar_lea.sflag [#allocation4], %s197
        %s199 = sand.u32 %s82, 1
        %s200 = smul.addr %s199, 8
        %s201 = scalar_lea.vmem [#allocation7], %s200
        %s202 = smul.u32 2, %s22
        %s203 = smul.u32 2, %s22
        %v204 = vld [vmem:[%s167] sm:$0xff]
        %v205 = vld [vmem:[%s167 + $0x8] sm:$0xff]
        %v206 = vld [vmem:[%s176] sm:$0xff]
        %v207 = vld [vmem:[%s176 + $0x8] sm:$0xff]
        %v208 = vmax.f32 %v204, 0.0
        %v209 = vmax.f32 %v205, 0.0
        %v210 = vmul.f32 %v204, %v206
        %v211 = vmul.f32 %v205, %v207
        %v212 = vsub.f32 %v208, %v210
        %v213 = vsub.f32 %v209, %v211
        %v214 = vand.u32 2147483647, %v204
        %v215 = vand.u32 2147483647, %v205
        %v216 = vsub.f32 0.0, %v214
        %v217 = vsub.f32 0.0, %v215
        %v218 = vmul.f32 %v216, 1.442695
        %v219 = vpow.pop %v218
        %v220 = vmul.f32 %v217, 1.442695
        %v221 = vpow.pop %v220
        %v222 = vadd.f32 %v219, 1.0
        %v223 = vlog2.pop %v222
        %v224 = vmul.f32 %v223, 0.6931472
        %v225 = vmul.f32 -0.5, %v219
        %v226 = vadd.f32 %v225, 1.0
        %v227 = vmul.f32 %v226, %v219
        %v228 = vand.u32 2147483647, %v219
        %vm229 = vcmp.lt.f32.partialorder %v228, 0.0004427343
        %v230 = vsel %vm229, %v227, %v224
        %v231 = vadd.f32 %v221, 1.0
        %v232 = vlog2.pop %v231
        %v233 = vmul.f32 %v232, 0.6931472
        %v234 = vmul.f32 -0.5, %v221
        %v235 = vadd.f32 %v234, 1.0
        %v236 = vmul.f32 %v235, %v221
        %v237 = vand.u32 2147483647, %v221
        %vm238 = vcmp.lt.f32.partialorder %v237, 0.0004427343
        %v239 = vsel %vm238, %v236, %v233
        %v240 = vadd.f32 %v212, %v230
        %v241 = vadd.f32 %v213, %v239
        %v242 = vadd.f32 %v240, %v241
        %243 = vst [vmem:[%s201] sm:$0xff] %v242
        %s244 = sand.u32 %s82, 1
        %s245 = scalar_lea.sflag [#allocation4], %s244
        %s246 = sand.u32 %s82, 1
        %s247 = smul.addr %s246, 8
        %s248 = scalar_lea.vmem [#allocation7], %s247
        // Predicated region
        $region37: #{tpu_custom_call.1} parent=27 // pred_check
          %p249 = pneg %p92
        $region38: #{tpu_custom_call.1} parent=27 // pred_check_branch
          %251 = sbr.rel (%p249) target = $region40
        $region39: #{tpu_custom_call.1} parent=27 // pred_region
          %s253 = ssub.s32 128, 128
          %254 = vsyncadd %s245, %s253
          %s255 = smul.addr %s22, 128
          %s256 = scalar_lea.hbm %s2, %s255
          %s258 = sshll.u32 %s248, 4
          %s259 = int_to_ptr.vmem [resolvable:$true] %s258
          %261 = dma.vmem_to_hbm [thread:$0]  %s259, 128, %s256, %s245
        $region40: #{tpu_custom_call.1} parent=27 // pred_fallthru
          _
      $region28: #{tpu_custom_call.1} parent=5 // pred_fallthru
        _
      %p262 = scmp.le.s32.totalorder 2, %s17
      // Predicated region
      $region41: #{tpu_custom_call.1} parent=5 // pred_check
        %p263 = pneg %p262
      $region42: #{tpu_custom_call.1} parent=5 // pred_check_branch
        %265 = sbr.rel (%p263) target = $region44
      $region43: #{tpu_custom_call.1} parent=5 // pred_region
        %s266 = ssub.s32 %s17, 2
        // Predicated region
        $region45: #{tpu_custom_call.1} parent=43 // pred_check
          %p267 = pneg %p98
        $region46: #{tpu_custom_call.1} parent=43 // pred_check_branch
          %269 = sbr.rel (%p267) target = $region48
        $region47: #{tpu_custom_call.1} parent=43 // pred_region
          %s270 = sand.u32 %s83, 1
          %s271 = scalar_lea.sflag [#allocation4], %s270
          %s272 = sand.u32 %s83, 1
          %s273 = smul.addr %s272, 8
          %s274 = scalar_lea.vmem [#allocation7], %s273
          %275 = dma.done %s271, 128
        $region48: #{tpu_custom_call.1} parent=43 // pred_fallthru
          _
      $region44: #{tpu_custom_call.1} parent=5 // pred_fallthru
        _
    $region6: #{tpu_custom_call.1} parent=1 // loop_footer
      %s21 = sadd.s32 1, %s17
    $region7: #{tpu_custom_call.1} parent=1 // loop_footer_branch
      %16 = sbr.rel target = $region3
    $region8: #{tpu_custom_call.1} parent=1 // loop_exit
      _
    %276 = vsyncpa [#allocation3], 1
    %s277 = scalar_lea.sflag [#allocation3], 1
    %278 = vsyncpa %s277, 1
    %279 = vsyncpa [#allocation6], 1
    %s280 = scalar_lea.sflag [#allocation6], 1
    %281 = vsyncpa %s280, 1
    %282 = vsyncpa [#allocation4], 1
    %s283 = scalar_lea.sflag [#allocation4], 1
    %284 = vsyncpa %s283, 1

</llo_original>
